<compile_context>
chip_gen: v7x
topology: tpu7x:2x2x1
jax: 0.10.0
libtpu: 0.0.40
codegen_flags: <defaults>
</compile_context>

<pallas_src>
import functools

import jax
import jax.numpy as jnp
from jax.experimental import pallas as pl
from jax.experimental.pallas import tpu as pltpu

# ---------------------------------------------------------------------------
# Model configuration (matches the module's __init__)
# ---------------------------------------------------------------------------
INPUT_DIM = 32                                  # params['model_arch']['encoder']['input_dim']
OUTPUT_DIM = 8                                  # params['model_arch']['encoder']['output_dim']
HIDDEN_DIMS = [512, 256, 128, 128, 64, 32]      # layer_1 .. layer_6
BN_EPS = 1e-5

MAX_TILE_B = 2048       # upper bound on the batch tile (fits every generation's VMEM)
_DIMS = [INPUT_DIM] + HIDDEN_DIMS + [OUTPUT_DIM]
_FLOPS_PER_ROW = 2 * sum(a * b for a, b in zip(_DIMS[:-1], _DIMS[1:]))   # 2 * 207104


def _round_up(x, m):
    return ((x + m - 1) // m) * m


def _epilogue_dtype_for_device():
    """bf16 bias/ReLU epilogue on bf16-VALU chips (v6e/v7x); f32 elsewhere (v5e & older)."""
    try:
        kind = jax.devices()[0].device_kind.lower()
    except Exception:
        kind = ""
    if ("v6" in kind) or ("v7" in kind):
        return jnp.bfloat16
    return jnp.float32


# ---------------------------------------------------------------------------
# Pallas kernel: fused 7-layer MLP on one batch tile
# ---------------------------------------------------------------------------
def _mlp_kernel(x_ref,
                w1_ref, w2_ref, w3_ref, w4_ref, w5_ref, w6_ref, w7_ref,
                b1_ref, b2_ref, b3_ref, b4_ref, b5_ref, b6_ref, b7_ref,
                o_ref, *, act_dtype):
    # Single bf16 cast of the input; all MXU inputs are bf16, accumulation f32.
    h = x_ref[...].astype(jnp.bfloat16)

    def layer(h_bf16, w_ref, b_ref):
        y = jnp.dot(h_bf16, w_ref[...], preferred_element_type=jnp.float32)
        y = y.astype(act_dtype) + b_ref[...].astype(act_dtype)   # bias add in epilogue dtype
        # ReLU, then store the inter-layer activation in bf16 (halves VMEM/vreg traffic;
        # it is also the next dot's MXU input dtype).
        return jnp.maximum(y, 0.0).astype(jnp.bfloat16)

    # layer_1 .. layer_6 : Linear (+ folded BatchNorm) -> ReLU -> Dropout(eval = identity)
    h = layer(h, w1_ref, b1_ref)
    h = layer(h, w2_ref, b2_ref)
    h = layer(h, w3_ref, b3_ref)
    h = layer(h, w4_ref, b4_ref)
    h = layer(h, w5_ref, b5_ref)
    h = layer(h, w6_ref, b6_ref)

    # layer_out : plain Linear (no BN / ReLU); keep the final bias add in f32.
    y = jnp.dot(h, w7_ref[...], preferred_element_type=jnp.float32)
    o_ref[...] = (y + b7_ref[...].astype(jnp.float32)).astype(o_ref.dtype)


# ---------------------------------------------------------------------------
# Wrapper: tiling, padding, pallas_call
# ---------------------------------------------------------------------------
def _pick_tile(B):
    if B <= 256:
        # Small batch: one tile, padded to the 8-sublane boundary.
        return _round_up(B, 8)
    # Large batch: aim for >= 4 grid steps (both v7x TCs via "parallel"), tiles a
    # multiple of 256 MXU rows, capped at MAX_TILE_B.
    return min(MAX_TILE_B, _round_up(-(-B // 4), 256))


def simple_nonlinear_forward(x, weights, biases, *, tile_b=None, act_dtype=None):
    """x: (B, INPUT_DIM) f32.  weights[i]: (in_i, out_i) bf16 (BN pre-folded).
    biases[i]: (1, out_i) f32.  Returns (B, OUTPUT_DIM) f32."""
    B, in_dim = x.shape
    assert in_dim == INPUT_DIM

    if act_dtype is None:
        act_dtype = _epilogue_dtype_for_device()
    if tile_b is None:
        tile_b = _pick_tile(B)

    b_pad = _round_up(B, tile_b)
    if b_pad != B:
        x = jnp.pad(x, ((0, b_pad - B), (0, 0)))
    grid = (pl.cdiv(b_pad, tile_b),)

    # Full-array specs with a constant index_map: the block index never changes across
    # grid steps, so Pallas copies each weight/bias into VMEM exactly once.
    def full_spec(arr):
        return pl.BlockSpec(arr.shape, lambda i: (0, 0))

    in_specs = (
        [pl.BlockSpec((tile_b, INPUT_DIM), lambda i: (i, 0))]
        + [full_spec(w) for w in weights]
        + [full_spec(b) for b in biases]
    )
    out_specs = pl.BlockSpec((tile_b, OUTPUT_DIM), lambda i: (i, 0))

    param_bytes = sum(int(a.size) * a.dtype.itemsize for a in list(weights) + list(biases))
    cost = pl.CostEstimate(
        flops=_FLOPS_PER_ROW * b_pad,
        transcendentals=0,
        bytes_accessed=b_pad * (INPUT_DIM * 4 + OUTPUT_DIM * 4) + param_bytes,
    )

    kernel = functools.partial(_mlp_kernel, act_dtype=act_dtype)

    out = pl.pallas_call(
        kernel,
        out_shape=jax.ShapeDtypeStruct((b_pad, OUTPUT_DIM), jnp.float32),
        grid_spec=pltpu.PrefetchScalarGridSpec(
            num_scalar_prefetch=0,
            grid=grid,
            in_specs=in_specs,
            out_specs=out_specs,
        ),
        compiler_params=pltpu.CompilerParams(
            dimension_semantics=("parallel",),   # batch tiles are independent
            vmem_limit_bytes=48 << 20,           # headroom for 2048-row tiles; < v7x 64 MiB
        ),
        cost_estimate=cost,
    )(x, *weights, *biases)

    return out[:B]


def simple_nonlinear_apply(x, weights, biases):
    """Mirror the module's forward() output dict ('prediction' == 'hidden')."""
    y = simple_nonlinear_forward(x, weights, biases)
    return {'prediction': y, 'adv_output': None, 'hidden': y,
            'classifier_hiddens': None, 'adv_hiddens': None}


# ---------------------------------------------------------------------------
# Parameter construction (mirrors initialize_parameters + BatchNorm1d defaults)
# ---------------------------------------------------------------------------
def _xavier_uniform(key, fan_in, fan_out):
    bound = jnp.sqrt(6.0 / (fan_in + fan_out))
    return jax.random.uniform(key, (fan_in, fan_out), jnp.float32, -bound, bound)


def fold_batchnorm(w, b, gamma, beta, mean, var, eps=BN_EPS):
    """Per-channel eval-mode BN fold into the preceding Linear:
       bn(y) = (y - mean) * gamma / sqrt(var + eps) + beta
       => W' = W * s (column-wise), b' = (b - mean) * s + beta, s = gamma/sqrt(var+eps)."""
    scale = gamma * jax.lax.rsqrt(var + eps)            # (out,)
    return w * scale[None, :], (b - mean) * scale + beta


def build_params(key):
    dims = [INPUT_DIM] + HIDDEN_DIMS + [OUTPUT_DIM]
    n_layers = len(dims) - 1
    keys = jax.random.split(key, n_layers)

    weights, biases = [], []
    for li in range(n_layers):
        fan_in, fan_out = dims[li], dims[li + 1]
        w = _xavier_uniform(keys[li], fan_in, fan_out)   # nn.init.xavier_uniform_
        b = jnp.zeros((fan_out,), jnp.float32)           # nn.init.zeros_(bias)
        if li < n_layers - 1:
            # BatchNorm1d defaults at init: gamma=1, beta=0, running_mean=0, running_var=1.
            gamma = jnp.ones((fan_out,), jnp.float32)
            beta = jnp.zeros((fan_out,), jnp.float32)
            mean = jnp.zeros((fan_out,), jnp.float32)
            var = jnp.ones((fan_out,), jnp.float32)
            w, b = fold_batchnorm(w, b, gamma, beta, mean, var)
        weights.append(w)
        biases.append(b.reshape(1, fan_out))
    return weights, biases


# ---------------------------------------------------------------------------
# Pure-JAX references for correctness checking
# ---------------------------------------------------------------------------
def reference_forward_f32(x, weights_f32, biases):
    """Pure-f32 reference (matches the PyTorch module's eval-mode math)."""
    h = x.astype(jnp.float32)
    n = len(weights_f32)
    for li, (w, b) in enumerate(zip(weights_f32, biases)):
        h = jnp.dot(h, w, preferred_element_type=jnp.float32) + b
        if li < n - 1:
            h = jnp.maximum(h, 0.0)
    return h


def reference_forward_matched(x, weights_bf16, biases, act_dtype):
    """Mirrors the kernel's cast structure exactly (bf16 MXU inputs, f32 acc,
    act_dtype epilogue, bf16 inter-layer storage)."""
    h = x.astype(jnp.bfloat16)
    n = len(weights_bf16)
    for li, (w, b) in enumerate(zip(weights_bf16, biases)):
        y = jnp.dot(h, w, preferred_element_type=jnp.float32)
        if li < n - 1:
            y = y.astype(act_dtype) + b.astype(act_dtype)
            h = jnp.maximum(y, 0.0).astype(jnp.bfloat16)
        else:
            return (y + b.astype(jnp.float32)).astype(jnp.float32)


if __name__ == "__main__":
    key = jax.random.PRNGKey(0)
    pkey, xkey = jax.random.split(key)

    weights_f32, biases = build_params(pkey)
    weights_bf16 = [w.astype(jnp.bfloat16) for w in weights_f32]   # cast once, host side
    act_dtype = _epilogue_dtype_for_device()

    # Small batch (single padded tile) and a larger batch (multi-tile grid, >= 2 steps).
    for batch in (4, 512):
        x = jax.random.normal(jax.random.fold_in(xkey, batch),
                              (batch, INPUT_DIM), jnp.float32)

        out_dict = simple_nonlinear_apply(x, weights_bf16, biases)
        out = jax.block_until_ready(out_dict['prediction'])
        assert out.shape == (batch, OUTPUT_DIM)
        assert out_dict['hidden'] is out_dict['prediction']

        # Tight check against a reference with identical precision/cast structure.
        ref_match = reference_forward_matched(x, weights_bf16, biases, act_dtype)
        assert jnp.allclose(out, ref_match, atol=2e-2, rtol=2e-2), \
            f"mismatch vs matched-precision reference (batch={batch})"

        # Loose sanity check against the pure-f32 reference (bf16 MXU/epilogue trade-off).
        ref_f32 = reference_forward_f32(x, weights_f32, biases)
        assert jnp.allclose(out, ref_f32, atol=1e-1, rtol=1e-1), \
            f"mismatch vs f32 reference (batch={batch})"

    # TODO(synk): training-mode BatchNorm (batch statistics) and Dropout random masks
    # are not modeled; eval-mode semantics are implemented instead.
    print("KERNEL_OK")
</pallas_src>

<mosaic_0001>
module attributes {stable_mosaic.version = 11 : i64} {
  func.func @_mlp_kernel(%arg0: i32, %arg1: memref<8x32xf32, #tpu.memory_space<vmem>>, %arg2: memref<32x512xbf16, #tpu.memory_space<vmem>>, %arg3: memref<512x256xbf16, #tpu.memory_space<vmem>>, %arg4: memref<256x128xbf16, #tpu.memory_space<vmem>>, %arg5: memref<128x128xbf16, #tpu.memory_space<vmem>>, %arg6: memref<128x64xbf16, #tpu.memory_space<vmem>>, %arg7: memref<64x32xbf16, #tpu.memory_space<vmem>>, %arg8: memref<32x8xbf16, #tpu.memory_space<vmem>>, %arg9: memref<1x512xf32, #tpu.memory_space<vmem>>, %arg10: memref<1x256xf32, #tpu.memory_space<vmem>>, %arg11: memref<1x128xf32, #tpu.memory_space<vmem>>, %arg12: memref<1x128xf32, #tpu.memory_space<vmem>>, %arg13: memref<1x64xf32, #tpu.memory_space<vmem>>, %arg14: memref<1x32xf32, #tpu.memory_space<vmem>>, %arg15: memref<1x8xf32, #tpu.memory_space<vmem>>, %arg16: memref<8x8xf32, #tpu.memory_space<vmem>>) attributes {dimension_semantics = [#tpu.dimension_semantics<parallel>], iteration_bounds = array<i64: 1>, scalar_prefetch = 0 : i64, scratch_operands = 0 : i64, tpu.core_type = #tpu.core_type<tc>, window_params = [{transform_indices = @transform_0, window_bounds = array<i64: 8, 32>}, {pipeline_mode = #tpu.pipeline_mode<synchronous>, transform_indices = @transform_1, window_bounds = array<i64: 32, 512>}, {pipeline_mode = #tpu.pipeline_mode<synchronous>, transform_indices = @transform_2, window_bounds = array<i64: 512, 256>}, {pipeline_mode = #tpu.pipeline_mode<synchronous>, transform_indices = @transform_3, window_bounds = array<i64: 256, 128>}, {pipeline_mode = #tpu.pipeline_mode<synchronous>, transform_indices = @transform_4, window_bounds = array<i64: 128, 128>}, {pipeline_mode = #tpu.pipeline_mode<synchronous>, transform_indices = @transform_5, window_bounds = array<i64: 128, 64>}, {pipeline_mode = #tpu.pipeline_mode<synchronous>, transform_indices = @transform_6, window_bounds = array<i64: 64, 32>}, {pipeline_mode = #tpu.pipeline_mode<synchronous>, transform_indices = @transform_7, window_bounds = array<i64: 32, 8>}, {pipeline_mode = #tpu.pipeline_mode<synchronous>, transform_indices = @transform_8, window_bounds = array<i64: 1, 512>}, {pipeline_mode = #tpu.pipeline_mode<synchronous>, transform_indices = @transform_9, window_bounds = array<i64: 1, 256>}, {pipeline_mode = #tpu.pipeline_mode<synchronous>, transform_indices = @transform_10, window_bounds = array<i64: 1, 128>}, {pipeline_mode = #tpu.pipeline_mode<synchronous>, transform_indices = @transform_11, window_bounds = array<i64: 1, 128>}, {pipeline_mode = #tpu.pipeline_mode<synchronous>, transform_indices = @transform_12, window_bounds = array<i64: 1, 64>}, {pipeline_mode = #tpu.pipeline_mode<synchronous>, transform_indices = @transform_13, window_bounds = array<i64: 1, 32>}, {pipeline_mode = #tpu.pipeline_mode<synchronous>, transform_indices = @transform_14, window_bounds = array<i64: 1, 8>}, {transform_indices = @transform_15, window_bounds = array<i64: 8, 8>}]} {
    %c0 = arith.constant 0 : index
    %c0_0 = arith.constant 0 : index
    %0 = vector.load %arg1[%c0, %c0_0] : memref<8x32xf32, #tpu.memory_space<vmem>>, vector<8x32xf32>
    %1 = arith.truncf %0 : vector<8x32xf32> to vector<8x32xbf16>
    %c0_1 = arith.constant 0 : index
    %c0_2 = arith.constant 0 : index
    %2 = vector.load %arg2[%c0_1, %c0_2] : memref<32x512xbf16, #tpu.memory_space<vmem>>, vector<32x512xbf16>
    %cst = arith.constant dense<0.000000e+00> : vector<8x512xf32>
    %3 = tpu.matmul %1, %2, %cst {dimension_numbers = #tpu.dot_dimension_numbers<[1], [0], [0], [1], [0, 0, 1, 1], [], []>} : vector<8x32xbf16>, vector<32x512xbf16>, vector<8x512xf32> -> vector<8x512xf32>
    %c0_3 = arith.constant 0 : index
    %c0_4 = arith.constant 0 : index
    %4 = vector.load %arg9[%c0_3, %c0_4] : memref<1x512xf32, #tpu.memory_space<vmem>>, vector<1x512xf32>
    %5 = vector.broadcast %4 : vector<1x512xf32> to vector<8x512xf32>
    %6 = arith.addf %3, %5 : vector<8x512xf32>
    %cst_5 = arith.constant 0.000000e+00 : f32
    %7 = vector.broadcast %cst_5 : f32 to vector<8x512xf32>
    %8 = arith.maximumf %6, %7 : vector<8x512xf32>
    %9 = arith.truncf %8 : vector<8x512xf32> to vector<8x512xbf16>
    %c0_6 = arith.constant 0 : index
    %c0_7 = arith.constant 0 : index
    %10 = vector.load %arg3[%c0_6, %c0_7] : memref<512x256xbf16, #tpu.memory_space<vmem>>, vector<512x256xbf16>
    %cst_8 = arith.constant dense<0.000000e+00> : vector<8x256xf32>
    %11 = tpu.matmul %9, %10, %cst_8 {dimension_numbers = #tpu.dot_dimension_numbers<[1], [0], [0], [1], [0, 0, 1, 1], [], []>} : vector<8x512xbf16>, vector<512x256xbf16>, vector<8x256xf32> -> vector<8x256xf32>
    %c0_9 = arith.constant 0 : index
    %c0_10 = arith.constant 0 : index
    %12 = vector.load %arg10[%c0_9, %c0_10] : memref<1x256xf32, #tpu.memory_space<vmem>>, vector<1x256xf32>
    %13 = vector.broadcast %12 : vector<1x256xf32> to vector<8x256xf32>
    %14 = arith.addf %11, %13 : vector<8x256xf32>
    %cst_11 = arith.constant 0.000000e+00 : f32
    %15 = vector.broadcast %cst_11 : f32 to vector<8x256xf32>
    %16 = arith.maximumf %14, %15 : vector<8x256xf32>
    %17 = arith.truncf %16 : vector<8x256xf32> to vector<8x256xbf16>
    %c0_12 = arith.constant 0 : index
    %c0_13 = arith.constant 0 : index
    %18 = vector.load %arg4[%c0_12, %c0_13] : memref<256x128xbf16, #tpu.memory_space<vmem>>, vector<256x128xbf16>
    %cst_14 = arith.constant dense<0.000000e+00> : vector<8x128xf32>
    %19 = tpu.matmul %17, %18, %cst_14 {dimension_numbers = #tpu.dot_dimension_numbers<[1], [0], [0], [1], [0, 0, 1, 1], [], []>} : vector<8x256xbf16>, vector<256x128xbf16>, vector<8x128xf32> -> vector<8x128xf32>
    %c0_15 = arith.constant 0 : index
    %c0_16 = arith.constant 0 : index
    %20 = vector.load %arg11[%c0_15, %c0_16] : memref<1x128xf32, #tpu.memory_space<vmem>>, vector<1x128xf32>
    %21 = vector.broadcast %20 : vector<1x128xf32> to vector<8x128xf32>
    %22 = arith.addf %19, %21 : vector<8x128xf32>
    %cst_17 = arith.constant 0.000000e+00 : f32
    %23 = vector.broadcast %cst_17 : f32 to vector<8x128xf32>
    %24 = arith.maximumf %22, %23 : vector<8x128xf32>
    %25 = arith.truncf %24 : vector<8x128xf32> to vector<8x128xbf16>
    %c0_18 = arith.constant 0 : index
    %c0_19 = arith.constant 0 : index
    %26 = vector.load %arg5[%c0_18, %c0_19] : memref<128x128xbf16, #tpu.memory_space<vmem>>, vector<128x128xbf16>
    %cst_20 = arith.constant dense<0.000000e+00> : vector<8x128xf32>
    %27 = tpu.matmul %25, %26, %cst_20 {dimension_numbers = #tpu.dot_dimension_numbers<[1], [0], [0], [1], [0, 0, 1, 1], [], []>} : vector<8x128xbf16>, vector<128x128xbf16>, vector<8x128xf32> -> vector<8x128xf32>
    %c0_21 = arith.constant 0 : index
    %c0_22 = arith.constant 0 : index
    %28 = vector.load %arg12[%c0_21, %c0_22] : memref<1x128xf32, #tpu.memory_space<vmem>>, vector<1x128xf32>
    %29 = vector.broadcast %28 : vector<1x128xf32> to vector<8x128xf32>
    %30 = arith.addf %27, %29 : vector<8x128xf32>
    %cst_23 = arith.constant 0.000000e+00 : f32
    %31 = vector.broadcast %cst_23 : f32 to vector<8x128xf32>
    %32 = arith.maximumf %30, %31 : vector<8x128xf32>
    %33 = arith.truncf %32 : vector<8x128xf32> to vector<8x128xbf16>
    %c0_24 = arith.constant 0 : index
    %c0_25 = arith.constant 0 : index
    %34 = vector.load %arg6[%c0_24, %c0_25] : memref<128x64xbf16, #tpu.memory_space<vmem>>, vector<128x64xbf16>
    %cst_26 = arith.constant dense<0.000000e+00> : vector<8x64xf32>
    %35 = tpu.matmul %33, %34, %cst_26 {dimension_numbers = #tpu.dot_dimension_numbers<[1], [0], [0], [1], [0, 0, 1, 1], [], []>} : vector<8x128xbf16>, vector<128x64xbf16>, vector<8x64xf32> -> vector<8x64xf32>
    %c0_27 = arith.constant 0 : index
    %c0_28 = arith.constant 0 : index
    %36 = vector.load %arg13[%c0_27, %c0_28] : memref<1x64xf32, #tpu.memory_space<vmem>>, vector<1x64xf32>
    %37 = vector.broadcast %36 : vector<1x64xf32> to vector<8x64xf32>
    %38 = arith.addf %35, %37 : vector<8x64xf32>
    %cst_29 = arith.constant 0.000000e+00 : f32
    %39 = vector.broadcast %cst_29 : f32 to vector<8x64xf32>
    %40 = arith.maximumf %38, %39 : vector<8x64xf32>
    %41 = arith.truncf %40 : vector<8x64xf32> to vector<8x64xbf16>
    %c0_30 = arith.constant 0 : index
    %c0_31 = arith.constant 0 : index
    %42 = vector.load %arg7[%c0_30, %c0_31] : memref<64x32xbf16, #tpu.memory_space<vmem>>, vector<64x32xbf16>
    %cst_32 = arith.constant dense<0.000000e+00> : vector<8x32xf32>
    %43 = tpu.matmul %41, %42, %cst_32 {dimension_numbers = #tpu.dot_dimension_numbers<[1], [0], [0], [1], [0, 0, 1, 1], [], []>} : vector<8x64xbf16>, vector<64x32xbf16>, vector<8x32xf32> -> vector<8x32xf32>
    %c0_33 = arith.constant 0 : index
    %c0_34 = arith.constant 0 : index
    %44 = vector.load %arg14[%c0_33, %c0_34] : memref<1x32xf32, #tpu.memory_space<vmem>>, vector<1x32xf32>
    %45 = vector.broadcast %44 : vector<1x32xf32> to vector<8x32xf32>
    %46 = arith.addf %43, %45 : vector<8x32xf32>
    %cst_35 = arith.constant 0.000000e+00 : f32
    %47 = vector.broadcast %cst_35 : f32 to vector<8x32xf32>
    %48 = arith.maximumf %46, %47 : vector<8x32xf32>
    %49 = arith.truncf %48 : vector<8x32xf32> to vector<8x32xbf16>
    %c0_36 = arith.constant 0 : index
    %c0_37 = arith.constant 0 : index
    %50 = vector.load %arg8[%c0_36, %c0_37] : memref<32x8xbf16, #tpu.memory_space<vmem>>, vector<32x8xbf16>
    %cst_38 = arith.constant dense<0.000000e+00> : vector<8x8xf32>
    %51 = tpu.matmul %49, %50, %cst_38 {dimension_numbers = #tpu.dot_dimension_numbers<[1], [0], [0], [1], [0, 0, 1, 1], [], []>} : vector<8x32xbf16>, vector<32x8xbf16>, vector<8x8xf32> -> vector<8x8xf32>
    %c0_39 = arith.constant 0 : index
    %c0_40 = arith.constant 0 : index
    %52 = vector.load %arg15[%c0_39, %c0_40] : memref<1x8xf32, #tpu.memory_space<vmem>>, vector<1x8xf32>
    %53 = vector.broadcast %52 : vector<1x8xf32> to vector<8x8xf32>
    %54 = arith.addf %51, %53 : vector<8x8xf32>
    %c0_41 = arith.constant 0 : index
    %c0_42 = arith.constant 0 : index
    %55 = vector.load %arg16[%c0_41, %c0_42] : memref<8x8xf32, #tpu.memory_space<vmem>>, vector<8x8xf32>
    tpu.vector_store %arg16[%c0_41, %c0_42], %54 {strides = array<i32>} : memref<8x8xf32, #tpu.memory_space<vmem>>, vector<8x8xf32>,
    return
  }
  func.func @transform_0(%arg0: i32) -> (i32, i32) {
    %c0_i32 = arith.constant 0 : i32
    %c0_i32_0 = arith.constant 0 : i32
    return %arg0, %c0_i32 : i32, i32
  }
  func.func @transform_1(%arg0: i32) -> (i32, i32) {
    %c0_i32 = arith.constant 0 : i32
    %c0_i32_0 = arith.constant 0 : i32
    %c0_i32_1 = arith.constant 0 : i32
    return %c0_i32, %c0_i32_0 : i32, i32
  }
  func.func @transform_2(%arg0: i32) -> (i32, i32) {
    %c0_i32 = arith.constant 0 : i32
    %c0_i32_0 = arith.constant 0 : i32
    %c0_i32_1 = arith.constant 0 : i32
    return %c0_i32, %c0_i32_0 : i32, i32
  }
  func.func @transform_3(%arg0: i32) -> (i32, i32) {
    %c0_i32 = arith.constant 0 : i32
    %c0_i32_0 = arith.constant 0 : i32
    %c0_i32_1 = arith.constant 0 : i32
    return %c0_i32, %c0_i32_0 : i32, i32
  }
  func.func @transform_4(%arg0: i32) -> (i32, i32) {
    %c0_i32 = arith.constant 0 : i32
    %c0_i32_0 = arith.constant 0 : i32
    %c0_i32_1 = arith.constant 0 : i32
    return %c0_i32, %c0_i32_0 : i32, i32
  }
  func.func @transform_5(%arg0: i32) -> (i32, i32) {
    %c0_i32 = arith.constant 0 : i32
    %c0_i32_0 = arith.constant 0 : i32
    %c0_i32_1 = arith.constant 0 : i32
    return %c0_i32, %c0_i32_0 : i32, i32
  }
  func.func @transform_6(%arg0: i32) -> (i32, i32) {
    %c0_i32 = arith.constant 0 : i32
    %c0_i32_0 = arith.constant 0 : i32
    %c0_i32_1 = arith.constant 0 : i32
    return %c0_i32, %c0_i32_0 : i32, i32
  }
  func.func @transform_7(%arg0: i32) -> (i32, i32) {
    %c0_i32 = arith.constant 0 : i32
    %c0_i32_0 = arith.constant 0 : i32
    %c0_i32_1 = arith.constant 0 : i32
    return %c0_i32, %c0_i32_0 : i32, i32
  }
  func.func @transform_8(%arg0: i32) -> (i32, i32) {
    %c0_i32 = arith.constant 0 : i32
    %c0_i32_0 = arith.constant 0 : i32
    %c0_i32_1 = arith.constant 0 : i32
    return %c0_i32, %c0_i32_0 : i32, i32
  }
  func.func @transform_9(%arg0: i32) -> (i32, i32) {
    %c0_i32 = arith.constant 0 : i32
    %c0_i32_0 = arith.constant 0 : i32
    %c0_i32_1 = arith.constant 0 : i32
    return %c0_i32, %c0_i32_0 : i32, i32
  }
  func.func @transform_10(%arg0: i32) -> (i32, i32) {
    %c0_i32 = arith.constant 0 : i32
    %c0_i32_0 = arith.constant 0 : i32
    %c0_i32_1 = arith.constant 0 : i32
    return %c0_i32, %c0_i32_0 : i32, i32
  }
  func.func @transform_11(%arg0: i32) -> (i32, i32) {
    %c0_i32 = arith.constant 0 : i32
    %c0_i32_0 = arith.constant 0 : i32
    %c0_i32_1 = arith.constant 0 : i32
    return %c0_i32, %c0_i32_0 : i32, i32
  }
  func.func @transform_12(%arg0: i32) -> (i32, i32) {
    %c0_i32 = arith.constant 0 : i32
    %c0_i32_0 = arith.constant 0 : i32
    %c0_i32_1 = arith.constant 0 : i32
    return %c0_i32, %c0_i32_0 : i32, i32
  }
  func.func @transform_13(%arg0: i32) -> (i32, i32) {
    %c0_i32 = arith.constant 0 : i32
    %c0_i32_0 = arith.constant 0 : i32
    %c0_i32_1 = arith.constant 0 : i32
    return %c0_i32, %c0_i32_0 : i32, i32
  }
  func.func @transform_14(%arg0: i32) -> (i32, i32) {
    %c0_i32 = arith.constant 0 : i32
    %c0_i32_0 = arith.constant 0 : i32
    %c0_i32_1 = arith.constant 0 : i32
    return %c0_i32, %c0_i32_0 : i32, i32
  }
  func.func @transform_15(%arg0: i32) -> (i32, i32) {
    %c0_i32 = arith.constant 0 : i32
    %c0_i32_0 = arith.constant 0 : i32
    return %arg0, %c0_i32 : i32, i32
  }
}

</mosaic_0001>

<llo_original>
// kernel: tpu_custom_call.1
$region0: #{tpu_custom_call.1}
  #allocation0 [shape = 'u32[]', space=smem, size = 0x4, offset = 0x4, fixed_abs, tag = 'smem constant byte address 0x4 - core index']
  #allocation1 [shape = 'u32[144,128]{1,0:T(1,128)}', space=vmem, size = 0x12000, scoped, tag = 'internal scratch']
  %s0 = inlined_call_operand.hbm [shape: f32[8,32], index: 0, kind: input, shape index: {}]
  %s1 = inlined_call_operand.hbm [shape: bf16[32,512], index: 1, kind: input, shape index: {}]
  %s2 = inlined_call_operand.hbm [shape: bf16[512,256], index: 2, kind: input, shape index: {}]
  %s3 = inlined_call_operand.vmem [shape: bf16[256,128], index: 3, kind: input, shape index: {}]
  %s4 = inlined_call_operand.hbm [shape: bf16[128,128], index: 4, kind: input, shape index: {}]
  %s5 = inlined_call_operand.vmem [shape: bf16[128,64], index: 5, kind: input, shape index: {}]
  %s6 = inlined_call_operand.vmem [shape: bf16[64,32], index: 6, kind: input, shape index: {}]
  %s7 = inlined_call_operand.vmem [shape: bf16[32,8], index: 7, kind: input, shape index: {}]
  %s8 = inlined_call_operand.vmem [shape: f32[1,512], index: 8, kind: input, shape index: {}]
  %s9 = inlined_call_operand.vmem [shape: f32[1,256], index: 9, kind: input, shape index: {}]
  %s10 = inlined_call_operand.vmem [shape: f32[1,128], index: 10, kind: input, shape index: {}]
  %s11 = inlined_call_operand.vmem [shape: f32[1,128], index: 11, kind: input, shape index: {}]
  %s12 = inlined_call_operand.vmem [shape: f32[1,64], index: 12, kind: input, shape index: {}]
  %s13 = inlined_call_operand.vmem [shape: f32[1,32], index: 13, kind: input, shape index: {}]
  %s14 = inlined_call_operand.vmem [shape: f32[1,8], index: 14, kind: input, shape index: {}]
  %s15 = inlined_call_operand.hbm [shape: f32[8,8], index: 15, kind: output, shape index: {}]
  %s16 = sld [smem:[#allocation0]]
  $region86: #{tpu_custom_call.1} parent=0
    _
  %s18 = ssub.s32 1, %s16
  %s19 = scalar_select 0, %s18, %s16
  $region1: #{tpu_custom_call.1} parent=0
    #allocation2 [shape = 'u8[4096]{0}', space=vmem, size = 0x1000, scoped, tag = 'input window, operand 0, single buffered']
    #allocation3 [shape = 's32[1]{0}', space=sflag, size = 0x4, scoped, tag = 'scoped memory for tpu_custom_call.1']
    #allocation4 [shape = 's32[1]{0}', space=sflag, size = 0x4, scoped, tag = 'scoped memory for tpu_custom_call.1']
    #allocation5 [shape = 'u8[32768]{0}', space=vmem, size = 0x8000, scoped, tag = 'input window, operand 1, single buffered']
    #allocation6 [shape = 's32[1]{0}', space=sflag, size = 0x4, scoped, tag = 'scoped memory for tpu_custom_call.1']
    #allocation7 [shape = 'u8[262144]{0}', space=vmem, size = 0x40000, scoped, tag = 'input window, operand 2, single buffered']
    #allocation8 [shape = 'u8[32768]{0}', space=vmem, size = 0x8000, scoped, tag = 'input window, operand 4, single buffered']
    #allocation9 [shape = 's32[1]{0}', space=sflag, size = 0x4, scoped, tag = 'scoped memory for tpu_custom_call.1']
    #allocation10 [shape = 'u8[4096]{0}', space=vmem, size = 0x1000, scoped, tag = 'output window, operand 0, single buffered']
    %20 = vsyncpa [#allocation3], 0
    %21 = vsyncpa [#allocation6], 0
    %22 = vsyncpa [#allocation9], 0
    %23 = vsyncpa [#allocation4], 0
    // Predicated region
    $region2: #{tpu_custom_call.1} parent=1 // pred_check
      _
    $region3: #{tpu_custom_call.1} parent=1 // pred_check_branch
      %25 = sbr.rel (0) target = $region5
    $region4: #{tpu_custom_call.1} parent=1 // pred_region
      %s27 = ssub.s32 128, 128
      %28 = vsyncadd [#allocation3], %s27
      %s30 = sshll.u32 [#allocation2], 4
      %s31 = int_to_ptr.vmem [resolvable:$true] %s30
      %33 = dma.hbm_to_vmem [thread:$0]  %s0, 128, %s31, [#allocation3]
    $region5: #{tpu_custom_call.1} parent=1 // pred_fallthru
      _
    // Predicated region
    $region6: #{tpu_custom_call.1} parent=1 // pred_check
      _
    $region7: #{tpu_custom_call.1} parent=1 // pred_check_branch
      %35 = sbr.rel (0) target = $region9
    $region8: #{tpu_custom_call.1} parent=1 // pred_region
      %s37 = ssub.s32 1024, 1024
      %38 = vsyncadd [#allocation6], %s37
      %s39 = sshll.u32 [#allocation5], 4
      %s40 = int_to_ptr.vmem [resolvable:$true] %s39
      %45 = dma.hbm_to_vmem [thread:$0]  %s1, 1024, %s40, [#allocation6], 256, 256, 16
    $region9: #{tpu_custom_call.1} parent=1 // pred_fallthru
      _
    // Predicated region
    $region10: #{tpu_custom_call.1} parent=1 // pred_check
      _
    $region11: #{tpu_custom_call.1} parent=1 // pred_check_branch
      %47 = sbr.rel (0) target = $region13
    $region12: #{tpu_custom_call.1} parent=1 // pred_region
      %s49 = ssub.s32 8192, 8192
      %50 = vsyncadd [#allocation6], %s49
      %s51 = sshll.u32 [#allocation7], 4
      %s52 = int_to_ptr.vmem [resolvable:$true] %s51
      %57 = dma.hbm_to_vmem [thread:$0]  %s2, 8192, %s52, [#allocation6], 128, 128, 8
    $region13: #{tpu_custom_call.1} parent=1 // pred_fallthru
      _
    // Predicated region
    $region14: #{tpu_custom_call.1} parent=1 // pred_check
      _
    $region15: #{tpu_custom_call.1} parent=1 // pred_check_branch
      %59 = sbr.rel (0) target = $region17
    $region16: #{tpu_custom_call.1} parent=1 // pred_region
      _
    $region17: #{tpu_custom_call.1} parent=1 // pred_fallthru
      _
    // Predicated region
    $region18: #{tpu_custom_call.1} parent=1 // pred_check
      _
    $region19: #{tpu_custom_call.1} parent=1 // pred_check_branch
      %61 = sbr.rel (0) target = $region21
    $region20: #{tpu_custom_call.1} parent=1 // pred_region
      %s63 = ssub.s32 1024, 1024
      %64 = vsyncadd [#allocation9], %s63
      %s65 = sshll.u32 [#allocation8], 4
      %s66 = int_to_ptr.vmem [resolvable:$true] %s65
      %71 = dma.hbm_to_vmem [thread:$0]  %s4, 1024, %s66, [#allocation9], 64, 64, 4
    $region21: #{tpu_custom_call.1} parent=1 // pred_fallthru
      _
    // Predicated region
    $region22: #{tpu_custom_call.1} parent=1 // pred_check
      _
    $region23: #{tpu_custom_call.1} parent=1 // pred_check_branch
      %73 = sbr.rel (0) target = $region25
    $region24: #{tpu_custom_call.1} parent=1 // pred_region
      _
    $region25: #{tpu_custom_call.1} parent=1 // pred_fallthru
      _
    // Predicated region
    $region26: #{tpu_custom_call.1} parent=1 // pred_check
      _
    $region27: #{tpu_custom_call.1} parent=1 // pred_check_branch
      %75 = sbr.rel (0) target = $region29
    $region28: #{tpu_custom_call.1} parent=1 // pred_region
      _
    $region29: #{tpu_custom_call.1} parent=1 // pred_fallthru
      _
    // Predicated region
    $region30: #{tpu_custom_call.1} parent=1 // pred_check
      _
    $region31: #{tpu_custom_call.1} parent=1 // pred_check_branch
      %77 = sbr.rel (0) target = $region33
    $region32: #{tpu_custom_call.1} parent=1 // pred_region
      _
    $region33: #{tpu_custom_call.1} parent=1 // pred_fallthru
      _
    // Predicated region
    $region34: #{tpu_custom_call.1} parent=1 // pred_check
      _
    $region35: #{tpu_custom_call.1} parent=1 // pred_check_branch
      %79 = sbr.rel (0) target = $region37
    $region36: #{tpu_custom_call.1} parent=1 // pred_region
      _
    $region37: #{tpu_custom_call.1} parent=1 // pred_fallthru
      _
    // Predicated region
    $region38: #{tpu_custom_call.1} parent=1 // pred_check
      _
    $region39: #{tpu_custom_call.1} parent=1 // pred_check_branch
      %81 = sbr.rel (0) target = $region41
    $region40: #{tpu_custom_call.1} parent=1 // pred_region
      _
    $region41: #{tpu_custom_call.1} parent=1 // pred_fallthru
      _
    // Predicated region
    $region42: #{tpu_custom_call.1} parent=1 // pred_check
      _
    $region43: #{tpu_custom_call.1} parent=1 // pred_check_branch
      %83 = sbr.rel (0) target = $region45
    $region44: #{tpu_custom_call.1} parent=1 // pred_region
      _
    $region45: #{tpu_custom_call.1} parent=1 // pred_fallthru
      _
    // Predicated region
    $region46: #{tpu_custom_call.1} parent=1 // pred_check
      _
    $region47: #{tpu_custom_call.1} parent=1 // pred_check_branch
      %85 = sbr.rel (0) target = $region49
    $region48: #{tpu_custom_call.1} parent=1 // pred_region
      _
    $region49: #{tpu_custom_call.1} parent=1 // pred_fallthru
      _
    // Predicated region
    $region50: #{tpu_custom_call.1} parent=1 // pred_check
      _
    $region51: #{tpu_custom_call.1} parent=1 // pred_check_branch
      %87 = sbr.rel (0) target = $region53
    $region52: #{tpu_custom_call.1} parent=1 // pred_region
      _
    $region53: #{tpu_custom_call.1} parent=1 // pred_fallthru
      _
    // Predicated region
    $region54: #{tpu_custom_call.1} parent=1 // pred_check
      _
    $region55: #{tpu_custom_call.1} parent=1 // pred_check_branch
      %89 = sbr.rel (0) target = $region57
    $region56: #{tpu_custom_call.1} parent=1 // pred_region
      _
    $region57: #{tpu_custom_call.1} parent=1 // pred_fallthru
      _
    // Predicated region
    $region58: #{tpu_custom_call.1} parent=1 // pred_check
      _
    $region59: #{tpu_custom_call.1} parent=1 // pred_check_branch
      %91 = sbr.rel (0) target = $region61
    $region60: #{tpu_custom_call.1} parent=1 // pred_region
      _
    $region61: #{tpu_custom_call.1} parent=1 // pred_fallthru
      _
    // Predicated region
    $region62: #{tpu_custom_call.1} parent=1 // pred_check
      _
    $region63: #{tpu_custom_call.1} parent=1 // pred_check_branch
      %93 = sbr.rel (0) target = $region65
    $region64: #{tpu_custom_call.1} parent=1 // pred_region
      %94 = dma.done [#allocation3], 128
    $region65: #{tpu_custom_call.1} parent=1 // pred_fallthru
      _
    // Predicated region
    $region66: #{tpu_custom_call.1} parent=1 // pred_check
      _
    $region67: #{tpu_custom_call.1} parent=1 // pred_check_branch
      %96 = sbr.rel (0) target = $region69
    $region68: #{tpu_custom_call.1} parent=1 // pred_region
      %97 = dma.done [#allocation6], 1024
    $region69: #{tpu_custom_call.1} parent=1 // pred_fallthru
      _
    // Predicated region
    $region70: #{tpu_custom_call.1} parent=1 // pred_check
      _
    $region71: #{tpu_custom_call.1} parent=1 // pred_check_branch
      %99 = sbr.rel (0) target = $region73
    $region72: #{tpu_custom_call.1} parent=1 // pred_region
      %100 = dma.done [#allocation6], 8192
    $region73: #{tpu_custom_call.1} parent=1 // pred_fallthru
      _
    // Predicated region
    $region74: #{tpu_custom_call.1} parent=1 // pred_check
      _
    $region75: #{tpu_custom_call.1} parent=1 // pred_check_branch
      %102 = sbr.rel (0) target = $region77
    $region76: #{tpu_custom_call.1} parent=1 // pred_region
      %103 = dma.done [#allocation9], 1024
    $region77: #{tpu_custom_call.1} parent=1 // pred_fallthru
      _
    %v105 = vld [vmem:[#allocation2] sm:$0xff]
    %v106 = vpack.c.bf16 %v105, %v105
    %v107 = vld [vmem:[#allocation5] sm:$0xff]
    %v108 = vld [vmem:[#allocation5 + $0x8] sm:$0xff]
    %v109 = vld [vmem:[#allocation5 + $0x10] sm:$0xff]
    %v110 = vld [vmem:[#allocation5 + $0x18] sm:$0xff]
    %v111 = vld [vmem:[#allocation5 + $0x20] sm:$0xff]
    %v112 = vld [vmem:[#allocation5 + $0x28] sm:$0xff]
    %v113 = vld [vmem:[#allocation5 + $0x30] sm:$0xff]
    %v114 = vld [vmem:[#allocation5 + $0x38] sm:$0xff]
    %v115 = vld [vmem:[%s8] sm:$0xf]
    %v117 = vlaneseq
    %v118 = vshrl.u32 %v117, 7
    %v119 = vsub.s32 0, %v118
    %v120 = vrot.slane %v115, %v119
    %v121 = vlaneseq
    %v122 = vshrl.u32 %v121, 7
    %v123 = vsub.s32 1, %v122
    %v124 = vrot.slane %v115, %v123
    %v125 = vlaneseq
    %v126 = vshrl.u32 %v125, 7
    %v127 = vsub.s32 2, %v126
    %v128 = vrot.slane %v115, %v127
    %v129 = vlaneseq
    %v130 = vshrl.u32 %v129, 7
    %v131 = vsub.s32 3, %v130
    %v132 = vrot.slane %v115, %v131
    %v145 = vunpack.c.l.b16 %v107
    %v146 = vunpack.c.h.b16 %v107
    %v147 = vunpack.c.l.b16 %v108
    %v148 = vunpack.c.h.b16 %v108
    %v149 = vunpack.c.l.b16 %v109
    %v150 = vunpack.c.h.b16 %v109
    %v151 = vunpack.c.l.b16 %v110
    %v152 = vunpack.c.h.b16 %v110
    %v153 = vunpack.c.l.b16 %v111
    %v154 = vunpack.c.h.b16 %v111
    %v155 = vunpack.c.l.b16 %v112
    %v156 = vunpack.c.h.b16 %v112
    %v157 = vunpack.c.l.b16 %v113
    %v158 = vunpack.c.h.b16 %v113
    %v159 = vunpack.c.l.b16 %v114
    %v160 = vunpack.c.h.b16 %v114
    %v161 = vpack.c.b16 %v149, %v145
    %v162 = vpack.c.b16 %v150, %v146
    %v163 = vpack.c.b16 %v151, %v147
    %v164 = vpack.c.b16 %v152, %v148
    %v165 = vpack.c.b16 %v157, %v153
    %v166 = vpack.c.b16 %v158, %v154
    %v167 = vpack.c.b16 %v159, %v155
    %v168 = vpack.c.b16 %v160, %v156
    %vm177 = vcmask 261120
    %v179 = vsel %vm177, %v106, 0
    %181 = vmatprep.subr.bf16.mxu0 %v162
    %182 = vmatpush1.bf16.msra.mxu0 %v161
    %183 = vmatprep.subr.bf16.mxu0 %v166
    %184 = vmatpush1.bf16.msra.mxu0 %v165
    %185 = vmatprep.subr.bf16.mxu0 0
    %186 = vmatpush1.bf16.msra.mxu0 0
    %187 = vmatprep.subr.bf16.mxu0 0
    %188 = vmatpush1.bf16.msra.mxu0 0
    %189 = vmatprep.subr.bf16.mxu0 0
    %190 = vmatpush1.bf16.msra.mxu0 0
    %191 = vmatprep.subr.bf16.mxu0 0
    %192 = vmatpush1.bf16.msra.mxu0 0
    %193 = vmatprep.subr.bf16.mxu0 0
    %194 = vmatpush1.bf16.msra.mxu0 0
    %195 = vmatprep.subr.bf16.mxu0 0
    %196 = vmatpush1.bf16.msra.mxu0 0
    %197 = vmatprep.subr.bf16.mxu0 0
    %198 = vmatpush1.bf16.msra.mxu0 0
    %199 = vmatprep.subr.bf16.mxu0 0
    %200 = vmatpush1.bf16.msra.mxu0 0
    %201 = vmatprep.subr.bf16.mxu0 0
    %202 = vmatpush1.bf16.msra.mxu0 0
    %203 = vmatprep.subr.bf16.mxu0 0
    %204 = vmatpush1.bf16.msra.mxu0 0
    %205 = vmatprep.subr.bf16.mxu0 0
    %206 = vmatpush1.bf16.msra.mxu0 0
    %207 = vmatprep.subr.bf16.mxu0 0
    %208 = vmatpush1.bf16.msra.mxu0 0
    %209 = vmatprep.subr.bf16.mxu0 0
    %210 = vmatpush1.bf16.msra.mxu0 0
    %211 = vmatprep.subr.bf16.mxu0 0
    %212 = vmatpush1.bf16.msra.mxu0 0
    %213 = vmatprep.mubr.bf16.mxu0 0
    %214 = vmatmul.mubr.bf16.gmra.mrb[0].mxu0 %v179
    %v215 = vpop.f32.mrb[0].mxu0
    %v216 = vadd.f32 %v120, %v215
    %v217 = vpop.f32.mrb[0].mxu0
    %v218 = vadd.f32 %v124, %v217
    %v219 = vpop.f32.mrb[0].mxu0
    %v220 = vpop.f32.mrb[0].mxu0
    %221 = vdwg.mxu0
    %222 = vmatprep.subr.bf16.mxu0 %v164
    %223 = vmatpush1.bf16.msra.mxu0 %v163
    %224 = vmatprep.subr.bf16.mxu0 %v168
    %225 = vmatpush1.bf16.msra.mxu0 %v167
    %226 = vmatprep.subr.bf16.mxu0 0
    %227 = vmatpush1.bf16.msra.mxu0 0
    %228 = vmatprep.subr.bf16.mxu0 0
    %229 = vmatpush1.bf16.msra.mxu0 0
    %230 = vmatprep.subr.bf16.mxu0 0
    %231 = vmatpush1.bf16.msra.mxu0 0
    %232 = vmatprep.subr.bf16.mxu0 0
    %233 = vmatpush1.bf16.msra.mxu0 0
    %234 = vmatprep.subr.bf16.mxu0 0
    %235 = vmatpush1.bf16.msra.mxu0 0
    %236 = vmatprep.subr.bf16.mxu0 0
    %237 = vmatpush1.bf16.msra.mxu0 0
    %238 = vmatprep.subr.bf16.mxu0 0
    %239 = vmatpush1.bf16.msra.mxu0 0
    %240 = vmatprep.subr.bf16.mxu0 0
    %241 = vmatpush1.bf16.msra.mxu0 0
    %242 = vmatprep.subr.bf16.mxu0 0
    %243 = vmatpush1.bf16.msra.mxu0 0
    %244 = vmatprep.subr.bf16.mxu0 0
    %245 = vmatpush1.bf16.msra.mxu0 0
    %246 = vmatprep.subr.bf16.mxu0 0
    %247 = vmatpush1.bf16.msra.mxu0 0
    %248 = vmatprep.subr.bf16.mxu0 0
    %249 = vmatpush1.bf16.msra.mxu0 0
    %250 = vmatprep.subr.bf16.mxu0 0
    %251 = vmatpush1.bf16.msra.mxu0 0
    %252 = vmatprep.subr.bf16.mxu0 0
    %253 = vmatpush1.bf16.msra.mxu0 0
    %254 = vmatprep.mubr.bf16.mxu0 0
    %255 = vmatmul.mubr.bf16.gmra.mrb[0].mxu0 %v179
    %v256 = vpop.f32.mrb[0].mxu0
    %v257 = vadd.f32 %v128, %v256
    %v258 = vpop.f32.mrb[0].mxu0
    %v259 = vadd.f32 %v132, %v258
    %v260 = vpop.f32.mrb[0].mxu0
    %v261 = vpop.f32.mrb[0].mxu0
    %262 = vdwg.mxu0
    %v263 = vmax.f32 %v216, 0.0
    %v264 = vmax.f32 %v218, 0.0
    %v265 = vmax.f32 %v257, 0.0
    %v266 = vmax.f32 %v259, 0.0
    %v267 = vpack.c.bf16 %v263, %v263
    %v268 = vpack.c.bf16 %v264, %v264
    %v269 = vpack.c.bf16 %v265, %v265
    %v270 = vpack.c.bf16 %v266, %v266
    %v271 = vld [vmem:[#allocation7] sm:$0xff]
    %v272 = vld [vmem:[#allocation7 + $0x8] sm:$0xff]
    %v273 = vld [vmem:[#allocation7 + $0x10] sm:$0xff]
    %v274 = vld [vmem:[#allocation7 + $0x18] sm:$0xff]
    %v275 = vld [vmem:[#allocation7 + $0x20] sm:$0xff]
    %v276 = vld [vmem:[#allocation7 + $0x28] sm:$0xff]
    %v277 = vld [vmem:[#allocation7 + $0x30] sm:$0xff]
    %v278 = vld [vmem:[#allocation7 + $0x38] sm:$0xff]
    %v279 = vld [vmem:[#allocation7 + $0x40] sm:$0xff]
    %v280 = vld [vmem:[#allocation7 + $0x48] sm:$0xff]
    %v281 = vld [vmem:[#allocation7 + $0x50] sm:$0xff]
    %v282 = vld [vmem:[#allocation7 + $0x58] sm:$0xff]
    %v283 = vld [vmem:[#allocation7 + $0x60] sm:$0xff]
    %v284 = vld [vmem:[#allocation7 + $0x68] sm:$0xff]
    %v285 = vld [vmem:[#allocation7 + $0x70] sm:$0xff]
    %v286 = vld [vmem:[#allocation7 + $0x78] sm:$0xff]
    %v287 = vld [vmem:[#allocation7 + $0x80] sm:$0xff]
    %v288 = vld [vmem:[#allocation7 + $0x88] sm:$0xff]
    %v289 = vld [vmem:[#allocation7 + $0x90] sm:$0xff]
    %v290 = vld [vmem:[#allocation7 + $0x98] sm:$0xff]
    %v291 = vld [vmem:[#allocation7 + $0xa0] sm:$0xff]
    %v292 = vld [vmem:[#allocation7 + $0xa8] sm:$0xff]
    %v293 = vld [vmem:[#allocation7 + $0xb0] sm:$0xff]
    %v294 = vld [vmem:[#allocation7 + $0xb8] sm:$0xff]
    %v295 = vld [vmem:[#allocation7 + $0xc0] sm:$0xff]
    %v296 = vld [vmem:[#allocation7 + $0xc8] sm:$0xff]
    %v297 = vld [vmem:[#allocation7 + $0xd0] sm:$0xff]
    %v298 = vld [vmem:[#allocation7 + $0xd8] sm:$0xff]
    %v299 = vld [vmem:[#allocation7 + $0xe0] sm:$0xff]
    %v300 = vld [vmem:[#allocation7 + $0xe8] sm:$0xff]
    %v301 = vld [vmem:[#allocation7 + $0xf0] sm:$0xff]
    %v302 = vld [vmem:[#allocation7 + $0xf8] sm:$0xff]
    %v303 = vld [vmem:[#allocation7 + $0x100] sm:$0xff]
    %v304 = vld [vmem:[#allocation7 + $0x108] sm:$0xff]
    %v305 = vld [vmem:[#allocation7 + $0x110] sm:$0xff]
    %v306 = vld [vmem:[#allocation7 + $0x118] sm:$0xff]
    %v307 = vld [vmem:[#allocation7 + $0x120] sm:$0xff]
    %v308 = vld [vmem:[#allocation7 + $0x128] sm:$0xff]
    %v309 = vld [vmem:[#allocation7 + $0x130] sm:$0xff]
    %v310 = vld [vmem:[#allocation7 + $0x138] sm:$0xff]
    %v311 = vld [vmem:[#allocation7 + $0x140] sm:$0xff]
    %v312 = vld [vmem:[#allocation7 + $0x148] sm:$0xff]
    %v313 = vld [vmem:[#allocation7 + $0x150] sm:$0xff]
    %v314 = vld [vmem:[#allocation7 + $0x158] sm:$0xff]
    %v315 = vld [vmem:[#allocation7 + $0x160] sm:$0xff]
    %v316 = vld [vmem:[#allocation7 + $0x168] sm:$0xff]
    %v317 = vld [vmem:[#allocation7 + $0x170] sm:$0xff]
    %v318 = vld [vmem:[#allocation7 + $0x178] sm:$0xff]
    %v319 = vld [vmem:[#allocation7 + $0x180] sm:$0xff]
    %v320 = vld [vmem:[#allocation7 + $0x188] sm:$0xff]
    %v321 = vld [vmem:[#allocation7 + $0x190] sm:$0xff]
    %v322 = vld [vmem:[#allocation7 + $0x198] sm:$0xff]
    %v323 = vld [vmem:[#allocation7 + $0x1a0] sm:$0xff]
    %v324 = vld [vmem:[#allocation7 + $0x1a8] sm:$0xff]
    %v325 = vld [vmem:[#allocation7 + $0x1b0] sm:$0xff]
    %v326 = vld [vmem:[#allocation7 + $0x1b8] sm:$0xff]
    %v327 = vld [vmem:[#allocation7 + $0x1c0] sm:$0xff]
    %v328 = vld [vmem:[#allocation7 + $0x1c8] sm:$0xff]
    %v329 = vld [vmem:[#allocation7 + $0x1d0] sm:$0xff]
    %v330 = vld [vmem:[#allocation7 + $0x1d8] sm:$0xff]
    %v331 = vld [vmem:[#allocation7 + $0x1e0] sm:$0xff]
    %v332 = vld [vmem:[#allocation7 + $0x1e8] sm:$0xff]
    %v333 = vld [vmem:[#allocation7 + $0x1f0] sm:$0xff]
    %v334 = vld [vmem:[#allocation7 + $0x1f8] sm:$0xff]
    %v335 = vld [vmem:[%s9] sm:$0x3]
    %v337 = vlaneseq
    %v338 = vshrl.u32 %v337, 7
    %v339 = vsub.s32 0, %v338
    %v340 = vrot.slane %v335, %v339
    %v341 = vlaneseq
    %v342 = vshrl.u32 %v341, 7
    %v343 = vsub.s32 1, %v342
    %v344 = vrot.slane %v335, %v343
    %v411 = vunpack.c.l.b16 %v271
    %v412 = vunpack.c.h.b16 %v271
    %v413 = vunpack.c.l.b16 %v272
    %v414 = vunpack.c.h.b16 %v272
    %v415 = vunpack.c.l.b16 %v273
    %v416 = vunpack.c.h.b16 %v273
    %v417 = vunpack.c.l.b16 %v274
    %v418 = vunpack.c.h.b16 %v274
    %v419 = vunpack.c.l.b16 %v275
    %v420 = vunpack.c.h.b16 %v275
    %v421 = vunpack.c.l.b16 %v276
    %v422 = vunpack.c.h.b16 %v276
    %v423 = vunpack.c.l.b16 %v277
    %v424 = vunpack.c.h.b16 %v277
    %v425 = vunpack.c.l.b16 %v278
    %v426 = vunpack.c.h.b16 %v278
    %v427 = vunpack.c.l.b16 %v279
    %v428 = vunpack.c.h.b16 %v279
    %v429 = vunpack.c.l.b16 %v280
    %v430 = vunpack.c.h.b16 %v280
    %v431 = vunpack.c.l.b16 %v281
    %v432 = vunpack.c.h.b16 %v281
    %v433 = vunpack.c.l.b16 %v282
    %v434 = vunpack.c.h.b16 %v282
    %v435 = vunpack.c.l.b16 %v283
    %v436 = vunpack.c.h.b16 %v283
    %v437 = vunpack.c.l.b16 %v284
    %v438 = vunpack.c.h.b16 %v284
    %v439 = vunpack.c.l.b16 %v285
    %v440 = vunpack.c.h.b16 %v285
    %v441 = vunpack.c.l.b16 %v286
    %v442 = vunpack.c.h.b16 %v286
    %v443 = vunpack.c.l.b16 %v287
    %v444 = vunpack.c.h.b16 %v287
    %v445 = vunpack.c.l.b16 %v288
    %v446 = vunpack.c.h.b16 %v288
    %v447 = vunpack.c.l.b16 %v289
    %v448 = vunpack.c.h.b16 %v289
    %v449 = vunpack.c.l.b16 %v290
    %v450 = vunpack.c.h.b16 %v290
    %v451 = vunpack.c.l.b16 %v291
    %v452 = vunpack.c.h.b16 %v291
    %v453 = vunpack.c.l.b16 %v292
    %v454 = vunpack.c.h.b16 %v292
    %v455 = vunpack.c.l.b16 %v293
    %v456 = vunpack.c.h.b16 %v293
    %v457 = vunpack.c.l.b16 %v294
    %v458 = vunpack.c.h.b16 %v294
    %v459 = vunpack.c.l.b16 %v295
    %v460 = vunpack.c.h.b16 %v295
    %v461 = vunpack.c.l.b16 %v296
    %v462 = vunpack.c.h.b16 %v296
    %v463 = vunpack.c.l.b16 %v297
    %v464 = vunpack.c.h.b16 %v297
    %v465 = vunpack.c.l.b16 %v298
    %v466 = vunpack.c.h.b16 %v298
    %v467 = vunpack.c.l.b16 %v299
    %v468 = vunpack.c.h.b16 %v299
    %v469 = vunpack.c.l.b16 %v300
    %v470 = vunpack.c.h.b16 %v300
    %v471 = vunpack.c.l.b16 %v301
    %v472 = vunpack.c.h.b16 %v301
    %v473 = vunpack.c.l.b16 %v302
    %v474 = vunpack.c.h.b16 %v302
    %v475 = vunpack.c.l.b16 %v303
    %v476 = vunpack.c.h.b16 %v303
    %v477 = vunpack.c.l.b16 %v304
    %v478 = vunpack.c.h.b16 %v304
    %v479 = vunpack.c.l.b16 %v305
    %v480 = vunpack.c.h.b16 %v305
    %v481 = vunpack.c.l.b16 %v306
    %v482 = vunpack.c.h.b16 %v306
    %v483 = vunpack.c.l.b16 %v307
    %v484 = vunpack.c.h.b16 %v307
    %v485 = vunpack.c.l.b16 %v308
    %v486 = vunpack.c.h.b16 %v308
    %v487 = vunpack.c.l.b16 %v309
    %v488 = vunpack.c.h.b16 %v309
    %v489 = vunpack.c.l.b16 %v310
    %v490 = vunpack.c.h.b16 %v310
    %v491 = vunpack.c.l.b16 %v311
    %v492 = vunpack.c.h.b16 %v311
    %v493 = vunpack.c.l.b16 %v312
    %v494 = vunpack.c.h.b16 %v312
    %v495 = vunpack.c.l.b16 %v313
    %v496 = vunpack.c.h.b16 %v313
    %v497 = vunpack.c.l.b16 %v314
    %v498 = vunpack.c.h.b16 %v314
    %v499 = vunpack.c.l.b16 %v315
    %v500 = vunpack.c.h.b16 %v315
    %v501 = vunpack.c.l.b16 %v316
    %v502 = vunpack.c.h.b16 %v316
    %v503 = vunpack.c.l.b16 %v317
    %v504 = vunpack.c.h.b16 %v317
    %v505 = vunpack.c.l.b16 %v318
    %v506 = vunpack.c.h.b16 %v318
    %v507 = vunpack.c.l.b16 %v319
    %v508 = vunpack.c.h.b16 %v319
    %v509 = vunpack.c.l.b16 %v320
    %v510 = vunpack.c.h.b16 %v320
    %v511 = vunpack.c.l.b16 %v321
    %v512 = vunpack.c.h.b16 %v321
    %v513 = vunpack.c.l.b16 %v322
    %v514 = vunpack.c.h.b16 %v322
    %v515 = vunpack.c.l.b16 %v323
    %v516 = vunpack.c.h.b16 %v323
    %v517 = vunpack.c.l.b16 %v324
    %v518 = vunpack.c.h.b16 %v324
    %v519 = vunpack.c.l.b16 %v325
    %v520 = vunpack.c.h.b16 %v325
    %v521 = vunpack.c.l.b16 %v326
    %v522 = vunpack.c.h.b16 %v326
    %v523 = vunpack.c.l.b16 %v327
    %v524 = vunpack.c.h.b16 %v327
    %v525 = vunpack.c.l.b16 %v328
    %v526 = vunpack.c.h.b16 %v328
    %v527 = vunpack.c.l.b16 %v329
    %v528 = vunpack.c.h.b16 %v329
    %v529 = vunpack.c.l.b16 %v330
    %v530 = vunpack.c.h.b16 %v330
    %v531 = vunpack.c.l.b16 %v331
    %v532 = vunpack.c.h.b16 %v331
    %v533 = vunpack.c.l.b16 %v332
    %v534 = vunpack.c.h.b16 %v332
    %v535 = vunpack.c.l.b16 %v333
    %v536 = vunpack.c.h.b16 %v333
    %v537 = vunpack.c.l.b16 %v334
    %v538 = vunpack.c.h.b16 %v334
    %v539 = vpack.c.b16 %v413, %v411
    %v540 = vpack.c.b16 %v414, %v412
    %v541 = vpack.c.b16 %v417, %v415
    %v542 = vpack.c.b16 %v418, %v416
    %v543 = vpack.c.b16 %v421, %v419
    %v544 = vpack.c.b16 %v422, %v420
    %v545 = vpack.c.b16 %v425, %v423
    %v546 = vpack.c.b16 %v426, %v424
    %v547 = vpack.c.b16 %v429, %v427
    %v548 = vpack.c.b16 %v430, %v428
    %v549 = vpack.c.b16 %v433, %v431
    %v550 = vpack.c.b16 %v434, %v432
    %v551 = vpack.c.b16 %v437, %v435
    %v552 = vpack.c.b16 %v438, %v436
    %v553 = vpack.c.b16 %v441, %v439
    %v554 = vpack.c.b16 %v442, %v440
    %v555 = vpack.c.b16 %v445, %v443
    %v556 = vpack.c.b16 %v446, %v444
    %v557 = vpack.c.b16 %v449, %v447
    %v558 = vpack.c.b16 %v450, %v448
    %v559 = vpack.c.b16 %v453, %v451
    %v560 = vpack.c.b16 %v454, %v452
    %v561 = vpack.c.b16 %v457, %v455
    %v562 = vpack.c.b16 %v458, %v456
    %v563 = vpack.c.b16 %v461, %v459
    %v564 = vpack.c.b16 %v462, %v460
    %v565 = vpack.c.b16 %v465, %v463
    %v566 = vpack.c.b16 %v466, %v464
    %v567 = vpack.c.b16 %v469, %v467
    %v568 = vpack.c.b16 %v470, %v468
    %v569 = vpack.c.b16 %v473, %v471
    %v570 = vpack.c.b16 %v474, %v472
    %v571 = vpack.c.b16 %v477, %v475
    %v572 = vpack.c.b16 %v478, %v476
    %v573 = vpack.c.b16 %v481, %v479
    %v574 = vpack.c.b16 %v482, %v480
    %v575 = vpack.c.b16 %v485, %v483
    %v576 = vpack.c.b16 %v486, %v484
    %v577 = vpack.c.b16 %v489, %v487
    %v578 = vpack.c.b16 %v490, %v488
    %v579 = vpack.c.b16 %v493, %v491
    %v580 = vpack.c.b16 %v494, %v492
    %v581 = vpack.c.b16 %v497, %v495
    %v582 = vpack.c.b16 %v498, %v496
    %v583 = vpack.c.b16 %v501, %v499
    %v584 = vpack.c.b16 %v502, %v500
    %v585 = vpack.c.b16 %v505, %v503
    %v586 = vpack.c.b16 %v506, %v504
    %v587 = vpack.c.b16 %v509, %v507
    %v588 = vpack.c.b16 %v510, %v508
    %v589 = vpack.c.b16 %v513, %v511
    %v590 = vpack.c.b16 %v514, %v512
    %v591 = vpack.c.b16 %v517, %v515
    %v592 = vpack.c.b16 %v518, %v516
    %v593 = vpack.c.b16 %v521, %v519
    %v594 = vpack.c.b16 %v522, %v520
    %v595 = vpack.c.b16 %v525, %v523
    %v596 = vpack.c.b16 %v526, %v524
    %v597 = vpack.c.b16 %v529, %v527
    %v598 = vpack.c.b16 %v530, %v528
    %v599 = vpack.c.b16 %v533, %v531
    %v600 = vpack.c.b16 %v534, %v532
    %v601 = vpack.c.b16 %v537, %v535
    %v602 = vpack.c.b16 %v538, %v536
    %667 = vmatprep.subr.bf16.mxu0 %v540
    %668 = vmatpush1.bf16.msra.mxu0 %v539
    %669 = vmatprep.subr.bf16.mxu0 %v542
    %670 = vmatpush1.bf16.msra.mxu0 %v541
    %671 = vmatprep.subr.bf16.mxu0 %v544
    %672 = vmatpush1.bf16.msra.mxu0 %v543
    %673 = vmatprep.subr.bf16.mxu0 %v546
    %674 = vmatpush1.bf16.msra.mxu0 %v545
    %675 = vmatprep.subr.bf16.mxu0 %v548
    %676 = vmatpush1.bf16.msra.mxu0 %v547
    %677 = vmatprep.subr.bf16.mxu0 %v550
    %678 = vmatpush1.bf16.msra.mxu0 %v549
    %679 = vmatprep.subr.bf16.mxu0 %v552
    %680 = vmatpush1.bf16.msra.mxu0 %v551
    %681 = vmatprep.subr.bf16.mxu0 %v554
    %682 = vmatpush1.bf16.msra.mxu0 %v553
    %683 = vmatprep.subr.bf16.mxu0 %v556
    %684 = vmatpush1.bf16.msra.mxu0 %v555
    %685 = vmatprep.subr.bf16.mxu0 %v558
    %686 = vmatpush1.bf16.msra.mxu0 %v557
    %687 = vmatprep.subr.bf16.mxu0 %v560
    %688 = vmatpush1.bf16.msra.mxu0 %v559
    %689 = vmatprep.subr.bf16.mxu0 %v562
    %690 = vmatpush1.bf16.msra.mxu0 %v561
    %691 = vmatprep.subr.bf16.mxu0 %v564
    %692 = vmatpush1.bf16.msra.mxu0 %v563
    %693 = vmatprep.subr.bf16.mxu0 %v566
    %694 = vmatpush1.bf16.msra.mxu0 %v565
    %695 = vmatprep.subr.bf16.mxu0 %v568
    %696 = vmatpush1.bf16.msra.mxu0 %v567
    %697 = vmatprep.subr.bf16.mxu0 %v570
    %698 = vmatpush1.bf16.msra.mxu0 %v569
    %699 = vmatprep.mubr.bf16.mxu0 %v268
    %700 = vmatmul.mubr.bf16.gmra.mrb[0].mxu0 %v267
    %v701 = vpop.f32.mrb[0].mxu0
    %v702 = vadd.f32 %v340, %v701
    %v703 = vpop.f32.mrb[0].mxu0
    %v704 = vadd.f32 %v344, %v703
    %v705 = vpop.f32.mrb[0].mxu0
    %v706 = vpop.f32.mrb[0].mxu0
    %707 = vdwg.mxu0
    %708 = vmatprep.subr.bf16.mxu0 %v572
    %709 = vmatpush1.bf16.msra.mxu0 %v571
    %710 = vmatprep.subr.bf16.mxu0 %v574
    %711 = vmatpush1.bf16.msra.mxu0 %v573
    %712 = vmatprep.subr.bf16.mxu0 %v576
    %713 = vmatpush1.bf16.msra.mxu0 %v575
    %714 = vmatprep.subr.bf16.mxu0 %v578
    %715 = vmatpush1.bf16.msra.mxu0 %v577
    %716 = vmatprep.subr.bf16.mxu0 %v580
    %717 = vmatpush1.bf16.msra.mxu0 %v579
    %718 = vmatprep.subr.bf16.mxu0 %v582
    %719 = vmatpush1.bf16.msra.mxu0 %v581
    %720 = vmatprep.subr.bf16.mxu0 %v584
    %721 = vmatpush1.bf16.msra.mxu0 %v583
    %722 = vmatprep.subr.bf16.mxu0 %v586
    %723 = vmatpush1.bf16.msra.mxu0 %v585
    %724 = vmatprep.subr.bf16.mxu0 %v588
    %725 = vmatpush1.bf16.msra.mxu0 %v587
    %726 = vmatprep.subr.bf16.mxu0 %v590
    %727 = vmatpush1.bf16.msra.mxu0 %v589
    %728 = vmatprep.subr.bf16.mxu0 %v592
    %729 = vmatpush1.bf16.msra.mxu0 %v591
    %730 = vmatprep.subr.bf16.mxu0 %v594
    %731 = vmatpush1.bf16.msra.mxu0 %v593
    %732 = vmatprep.subr.bf16.mxu0 %v596
    %733 = vmatpush1.bf16.msra.mxu0 %v595
    %734 = vmatprep.subr.bf16.mxu0 %v598
    %735 = vmatpush1.bf16.msra.mxu0 %v597
    %736 = vmatprep.subr.bf16.mxu0 %v600
    %737 = vmatpush1.bf16.msra.mxu0 %v599
    %738 = vmatprep.subr.bf16.mxu0 %v602
    %739 = vmatpush1.bf16.msra.mxu0 %v601
    %740 = vmatprep.mubr.bf16.mxu0 %v270
    %741 = vmatmul.mubr.bf16.gmra.mrb[0].mxu0 %v269
    %v742 = vpop.f32.mrb[0].mxu0
    %v743 = vadd.f32 %v702, %v742
    %v744 = vpop.f32.mrb[0].mxu0
    %v745 = vadd.f32 %v704, %v744
    %v746 = vpop.f32.mrb[0].mxu0
    %v747 = vpop.f32.mrb[0].mxu0
    %748 = vdwg.mxu0
    %v749 = vmax.f32 %v743, 0.0
    %v750 = vmax.f32 %v745, 0.0
    %v751 = vpack.c.bf16 %v749, %v749
    %v752 = vpack.c.bf16 %v750, %v750
    %v753 = vld [vmem:[%s3] sm:$0xf]
    %v754 = vld [vmem:[%s3 + $0x4] sm:$0xf]
    %v755 = vld [vmem:[%s3 + $0x8] sm:$0xf]
    %v756 = vld [vmem:[%s3 + $0xc] sm:$0xf]
    %v757 = vld [vmem:[%s3 + $0x10] sm:$0xf]
    %v758 = vld [vmem:[%s3 + $0x14] sm:$0xf]
    %v759 = vld [vmem:[%s3 + $0x18] sm:$0xf]
    %v760 = vld [vmem:[%s3 + $0x1c] sm:$0xf]
    %v761 = vld [vmem:[%s3 + $0x20] sm:$0xf]
    %v762 = vld [vmem:[%s3 + $0x24] sm:$0xf]
    %v763 = vld [vmem:[%s3 + $0x28] sm:$0xf]
    %v764 = vld [vmem:[%s3 + $0x2c] sm:$0xf]
    %v765 = vld [vmem:[%s3 + $0x30] sm:$0xf]
    %v766 = vld [vmem:[%s3 + $0x34] sm:$0xf]
    %v767 = vld [vmem:[%s3 + $0x38] sm:$0xf]
    %v768 = vld [vmem:[%s3 + $0x3c] sm:$0xf]
    %v769 = vld [vmem:[%s3 + $0x40] sm:$0xf]
    %v770 = vld [vmem:[%s3 + $0x44] sm:$0xf]
    %v771 = vld [vmem:[%s3 + $0x48] sm:$0xf]
    %v772 = vld [vmem:[%s3 + $0x4c] sm:$0xf]
    %v773 = vld [vmem:[%s3 + $0x50] sm:$0xf]
    %v774 = vld [vmem:[%s3 + $0x54] sm:$0xf]
    %v775 = vld [vmem:[%s3 + $0x58] sm:$0xf]
    %v776 = vld [vmem:[%s3 + $0x5c] sm:$0xf]
    %v777 = vld [vmem:[%s3 + $0x60] sm:$0xf]
    %v778 = vld [vmem:[%s3 + $0x64] sm:$0xf]
    %v779 = vld [vmem:[%s3 + $0x68] sm:$0xf]
    %v780 = vld [vmem:[%s3 + $0x6c] sm:$0xf]
    %v781 = vld [vmem:[%s3 + $0x70] sm:$0xf]
    %v782 = vld [vmem:[%s3 + $0x74] sm:$0xf]
    %v783 = vld [vmem:[%s3 + $0x78] sm:$0xf]
    %v784 = vld [vmem:[%s3 + $0x7c] sm:$0xf]
    %v785 = vld [vmem:[%s10] sm:$0x1]
    %v787 = vlaneseq
    %v788 = vshrl.u32 %v787, 7
    %v789 = vsub.s32 0, %v788
    %v790 = vrot.slane %v785, %v789
    %v824 = vunpack.c.l.b16 %v753
    %v825 = vunpack.c.l.b16 %v754
    %v826 = vunpack.c.l.b16 %v755
    %v827 = vunpack.c.l.b16 %v756
    %v828 = vunpack.c.l.b16 %v757
    %v829 = vunpack.c.l.b16 %v758
    %v830 = vunpack.c.l.b16 %v759
    %v831 = vunpack.c.l.b16 %v760
    %v832 = vunpack.c.l.b16 %v761
    %v833 = vunpack.c.l.b16 %v762
    %v834 = vunpack.c.l.b16 %v763
    %v835 = vunpack.c.l.b16 %v764
    %v836 = vunpack.c.l.b16 %v765
    %v837 = vunpack.c.l.b16 %v766
    %v838 = vunpack.c.l.b16 %v767
    %v839 = vunpack.c.l.b16 %v768
    %v840 = vunpack.c.l.b16 %v769
    %v841 = vunpack.c.l.b16 %v770
    %v842 = vunpack.c.l.b16 %v771
    %v843 = vunpack.c.l.b16 %v772
    %v844 = vunpack.c.l.b16 %v773
    %v845 = vunpack.c.l.b16 %v774
    %v846 = vunpack.c.l.b16 %v775
    %v847 = vunpack.c.l.b16 %v776
    %v848 = vunpack.c.l.b16 %v777
    %v849 = vunpack.c.l.b16 %v778
    %v850 = vunpack.c.l.b16 %v779
    %v851 = vunpack.c.l.b16 %v780
    %v852 = vunpack.c.l.b16 %v781
    %v853 = vunpack.c.l.b16 %v782
    %v854 = vunpack.c.l.b16 %v783
    %v855 = vunpack.c.l.b16 %v784
    %v856 = vpack.c.b16 %v825, %v824
    %v857 = vpack.c.b16 %v827, %v826
    %v858 = vpack.c.b16 %v829, %v828
    %v859 = vpack.c.b16 %v831, %v830
    %v860 = vpack.c.b16 %v833, %v832
    %v861 = vpack.c.b16 %v835, %v834
    %v862 = vpack.c.b16 %v837, %v836
    %v863 = vpack.c.b16 %v839, %v838
    %v864 = vpack.c.b16 %v841, %v840
    %v865 = vpack.c.b16 %v843, %v842
    %v866 = vpack.c.b16 %v845, %v844
    %v867 = vpack.c.b16 %v847, %v846
    %v868 = vpack.c.b16 %v849, %v848
    %v869 = vpack.c.b16 %v851, %v850
    %v870 = vpack.c.b16 %v853, %v852
    %v871 = vpack.c.b16 %v855, %v854
    %888 = vmatprep.subr.bf16.mxu0 0
    %889 = vmatpush1.bf16.msra.mxu0 %v856
    %890 = vmatprep.subr.bf16.mxu0 0
    %891 = vmatpush1.bf16.msra.mxu0 %v857
    %892 = vmatprep.subr.bf16.mxu0 0
    %893 = vmatpush1.bf16.msra.mxu0 %v858
    %894 = vmatprep.subr.bf16.mxu0 0
    %895 = vmatpush1.bf16.msra.mxu0 %v859
    %896 = vmatprep.subr.bf16.mxu0 0
    %897 = vmatpush1.bf16.msra.mxu0 %v860
    %898 = vmatprep.subr.bf16.mxu0 0
    %899 = vmatpush1.bf16.msra.mxu0 %v861
    %900 = vmatprep.subr.bf16.mxu0 0
    %901 = vmatpush1.bf16.msra.mxu0 %v862
    %902 = vmatprep.subr.bf16.mxu0 0
    %903 = vmatpush1.bf16.msra.mxu0 %v863
    %904 = vmatprep.subr.bf16.mxu0 0
    %905 = vmatpush1.bf16.msra.mxu0 %v864
    %906 = vmatprep.subr.bf16.mxu0 0
    %907 = vmatpush1.bf16.msra.mxu0 %v865
    %908 = vmatprep.subr.bf16.mxu0 0
    %909 = vmatpush1.bf16.msra.mxu0 %v866
    %910 = vmatprep.subr.bf16.mxu0 0
    %911 = vmatpush1.bf16.msra.mxu0 %v867
    %912 = vmatprep.subr.bf16.mxu0 0
    %913 = vmatpush1.bf16.msra.mxu0 %v868
    %914 = vmatprep.subr.bf16.mxu0 0
    %915 = vmatpush1.bf16.msra.mxu0 %v869
    %916 = vmatprep.subr.bf16.mxu0 0
    %917 = vmatpush1.bf16.msra.mxu0 %v870
    %918 = vmatprep.subr.bf16.mxu0 0
    %919 = vmatpush1.bf16.msra.mxu0 %v871
    %920 = vmatprep.mubr.bf16.mxu0 %v752
    %921 = vmatmul.mubr.bf16.gmra.mrb[0].mxu0 %v751
    %v922 = vpop.f32.mrb[0].mxu0
    %v923 = vadd.f32 %v790, %v922
    %v924 = vpop.f32.mrb[0].mxu0
    %v925 = vpop.f32.mrb[0].mxu0
    %v926 = vpop.f32.mrb[0].mxu0
    %927 = vdwg.mxu0
    %v928 = vmax.f32 %v923, 0.0
    %v929 = vpack.c.bf16 %v928, %v928
    %v930 = vld [vmem:[#allocation8] sm:$0xf]
    %v931 = vld [vmem:[#allocation8 + $0x4] sm:$0xf]
    %v932 = vld [vmem:[#allocation8 + $0x8] sm:$0xf]
    %v933 = vld [vmem:[#allocation8 + $0xc] sm:$0xf]
    %v934 = vld [vmem:[#allocation8 + $0x10] sm:$0xf]
    %v935 = vld [vmem:[#allocation8 + $0x14] sm:$0xf]
    %v936 = vld [vmem:[#allocation8 + $0x18] sm:$0xf]
    %v937 = vld [vmem:[#allocation8 + $0x1c] sm:$0xf]
    %v938 = vld [vmem:[#allocation8 + $0x20] sm:$0xf]
    %v939 = vld [vmem:[#allocation8 + $0x24] sm:$0xf]
    %v940 = vld [vmem:[#allocation8 + $0x28] sm:$0xf]
    %v941 = vld [vmem:[#allocation8 + $0x2c] sm:$0xf]
    %v942 = vld [vmem:[#allocation8 + $0x30] sm:$0xf]
    %v943 = vld [vmem:[#allocation8 + $0x34] sm:$0xf]
    %v944 = vld [vmem:[#allocation8 + $0x38] sm:$0xf]
    %v945 = vld [vmem:[#allocation8 + $0x3c] sm:$0xf]
    %v946 = vld [vmem:[%s11] sm:$0x1]
    %v948 = vlaneseq
    %v949 = vshrl.u32 %v948, 7
    %v950 = vsub.s32 0, %v949
    %v951 = vrot.slane %v946, %v950
    %v969 = vunpack.c.l.b16 %v930
    %v970 = vunpack.c.l.b16 %v931
    %v971 = vunpack.c.l.b16 %v932
    %v972 = vunpack.c.l.b16 %v933
    %v973 = vunpack.c.l.b16 %v934
    %v974 = vunpack.c.l.b16 %v935
    %v975 = vunpack.c.l.b16 %v936
    %v976 = vunpack.c.l.b16 %v937
    %v977 = vunpack.c.l.b16 %v938
    %v978 = vunpack.c.l.b16 %v939
    %v979 = vunpack.c.l.b16 %v940
    %v980 = vunpack.c.l.b16 %v941
    %v981 = vunpack.c.l.b16 %v942
    %v982 = vunpack.c.l.b16 %v943
    %v983 = vunpack.c.l.b16 %v944
    %v984 = vunpack.c.l.b16 %v945
    %v985 = vpack.c.b16 %v970, %v969
    %v986 = vpack.c.b16 %v972, %v971
    %v987 = vpack.c.b16 %v974, %v973
    %v988 = vpack.c.b16 %v976, %v975
    %v989 = vpack.c.b16 %v978, %v977
    %v990 = vpack.c.b16 %v980, %v979
    %v991 = vpack.c.b16 %v982, %v981
    %v992 = vpack.c.b16 %v984, %v983
    %1001 = vmatprep.subr.bf16.mxu0 0
    %1002 = vmatpush1.bf16.msra.mxu0 %v985
    %1003 = vmatprep.subr.bf16.mxu0 0
    %1004 = vmatpush1.bf16.msra.mxu0 %v986
    %1005 = vmatprep.subr.bf16.mxu0 0
    %1006 = vmatpush1.bf16.msra.mxu0 %v987
    %1007 = vmatprep.subr.bf16.mxu0 0
    %1008 = vmatpush1.bf16.msra.mxu0 %v988
    %1009 = vmatprep.subr.bf16.mxu0 0
    %1010 = vmatpush1.bf16.msra.mxu0 %v989
    %1011 = vmatprep.subr.bf16.mxu0 0
    %1012 = vmatpush1.bf16.msra.mxu0 %v990
    %1013 = vmatprep.subr.bf16.mxu0 0
    %1014 = vmatpush1.bf16.msra.mxu0 %v991
    %1015 = vmatprep.subr.bf16.mxu0 0
    %1016 = vmatpush1.bf16.msra.mxu0 %v992
    %1017 = vmatprep.subr.bf16.mxu0 0
    %1018 = vmatpush1.bf16.msra.mxu0 0
    %1019 = vmatprep.subr.bf16.mxu0 0
    %1020 = vmatpush1.bf16.msra.mxu0 0
    %1021 = vmatprep.subr.bf16.mxu0 0
    %1022 = vmatpush1.bf16.msra.mxu0 0
    %1023 = vmatprep.subr.bf16.mxu0 0
    %1024 = vmatpush1.bf16.msra.mxu0 0
    %1025 = vmatprep.subr.bf16.mxu0 0
    %1026 = vmatpush1.bf16.msra.mxu0 0
    %1027 = vmatprep.subr.bf16.mxu0 0
    %1028 = vmatpush1.bf16.msra.mxu0 0
    %1029 = vmatprep.subr.bf16.mxu0 0
    %1030 = vmatpush1.bf16.msra.mxu0 0
    %1031 = vmatprep.subr.bf16.mxu0 0
    %1032 = vmatpush1.bf16.msra.mxu0 0
    %1033 = vmatprep.mubr.bf16.mxu0 0
    %1034 = vmatmul.mubr.bf16.gmra.mrb[0].mxu0 %v929
    %v1035 = vpop.f32.mrb[0].mxu0
    %v1036 = vadd.f32 %v951, %v1035
    %v1037 = vpop.f32.mrb[0].mxu0
    %v1038 = vpop.f32.mrb[0].mxu0
    %v1039 = vpop.f32.mrb[0].mxu0
    %1040 = vdwg.mxu0
    %v1041 = vmax.f32 %v1036, 0.0
    %v1042 = vpack.c.bf16 %v1041, %v1041
    %v1043 = vld [vmem:[%s5] sm:$0xf]
    %v1044 = vld [vmem:[%s5 + $0x4] sm:$0xf]
    %v1045 = vld [vmem:[%s5 + $0x8] sm:$0xf]
    %v1046 = vld [vmem:[%s5 + $0xc] sm:$0xf]
    %v1047 = vld [vmem:[%s5 + $0x10] sm:$0xf]
    %v1048 = vld [vmem:[%s5 + $0x14] sm:$0xf]
    %v1049 = vld [vmem:[%s5 + $0x18] sm:$0xf]
    %v1050 = vld [vmem:[%s5 + $0x1c] sm:$0xf]
    %v1051 = vld [vmem:[%s5 + $0x20] sm:$0xf]
    %v1052 = vld [vmem:[%s5 + $0x24] sm:$0xf]
    %v1053 = vld [vmem:[%s5 + $0x28] sm:$0xf]
    %v1054 = vld [vmem:[%s5 + $0x2c] sm:$0xf]
    %v1055 = vld [vmem:[%s5 + $0x30] sm:$0xf]
    %v1056 = vld [vmem:[%s5 + $0x34] sm:$0xf]
    %v1057 = vld [vmem:[%s5 + $0x38] sm:$0xf]
    %v1058 = vld [vmem:[%s5 + $0x3c] sm:$0xf]
    %v1059 = vld [vmem:[%s12] sm:$0x1]
    %v1061 = vlaneseq
    %v1062 = vshrl.u32 %v1061, 7
    %v1063 = vsub.s32 0, %v1062
    %v1064 = vrot.slane %v1059, %v1063
    %v1082 = vunpack.c.l.b16 %v1043
    %v1083 = vunpack.c.l.b16 %v1044
    %v1084 = vunpack.c.l.b16 %v1045
    %v1085 = vunpack.c.l.b16 %v1046
    %v1086 = vunpack.c.l.b16 %v1047
    %v1087 = vunpack.c.l.b16 %v1048
    %v1088 = vunpack.c.l.b16 %v1049
    %v1089 = vunpack.c.l.b16 %v1050
    %v1090 = vunpack.c.l.b16 %v1051
    %v1091 = vunpack.c.l.b16 %v1052
    %v1092 = vunpack.c.l.b16 %v1053
    %v1093 = vunpack.c.l.b16 %v1054
    %v1094 = vunpack.c.l.b16 %v1055
    %v1095 = vunpack.c.l.b16 %v1056
    %v1096 = vunpack.c.l.b16 %v1057
    %v1097 = vunpack.c.l.b16 %v1058
    %v1098 = vpack.c.b16 %v1083, %v1082
    %v1099 = vpack.c.b16 %v1085, %v1084
    %v1100 = vpack.c.b16 %v1087, %v1086
    %v1101 = vpack.c.b16 %v1089, %v1088
    %v1102 = vpack.c.b16 %v1091, %v1090
    %v1103 = vpack.c.b16 %v1093, %v1092
    %v1104 = vpack.c.b16 %v1095, %v1094
    %v1105 = vpack.c.b16 %v1097, %v1096
    %1114 = vmatprep.subr.bf16.mxu0 0
    %1115 = vmatpush1.bf16.msra.mxu0 %v1098
    %1116 = vmatprep.subr.bf16.mxu0 0
    %1117 = vmatpush1.bf16.msra.mxu0 %v1099
    %1118 = vmatprep.subr.bf16.mxu0 0
    %1119 = vmatpush1.bf16.msra.mxu0 %v1100
    %1120 = vmatprep.subr.bf16.mxu0 0
    %1121 = vmatpush1.bf16.msra.mxu0 %v1101
    %1122 = vmatprep.subr.bf16.mxu0 0
    %1123 = vmatpush1.bf16.msra.mxu0 %v1102
    %1124 = vmatprep.subr.bf16.mxu0 0
    %1125 = vmatpush1.bf16.msra.mxu0 %v1103
    %1126 = vmatprep.subr.bf16.mxu0 0
    %1127 = vmatpush1.bf16.msra.mxu0 %v1104
    %1128 = vmatprep.subr.bf16.mxu0 0
    %1129 = vmatpush1.bf16.msra.mxu0 %v1105
    %1130 = vmatprep.subr.bf16.mxu0 0
    %1131 = vmatpush1.bf16.msra.mxu0 0
    %1132 = vmatprep.subr.bf16.mxu0 0
    %1133 = vmatpush1.bf16.msra.mxu0 0
    %1134 = vmatprep.subr.bf16.mxu0 0
    %1135 = vmatpush1.bf16.msra.mxu0 0
    %1136 = vmatprep.subr.bf16.mxu0 0
    %1137 = vmatpush1.bf16.msra.mxu0 0
    %1138 = vmatprep.subr.bf16.mxu0 0
    %1139 = vmatpush1.bf16.msra.mxu0 0
    %1140 = vmatprep.subr.bf16.mxu0 0
    %1141 = vmatpush1.bf16.msra.mxu0 0
    %1142 = vmatprep.subr.bf16.mxu0 0
    %1143 = vmatpush1.bf16.msra.mxu0 0
    %1144 = vmatprep.subr.bf16.mxu0 0
    %1145 = vmatpush1.bf16.msra.mxu0 0
    %1146 = vmatprep.mubr.bf16.mxu0 0
    %1147 = vmatmul.mubr.bf16.gmra.mrb[0].mxu0 %v1042
    %v1148 = vpop.f32.mrb[0].mxu0
    %v1149 = vadd.f32 %v1064, %v1148
    %v1150 = vpop.f32.mrb[0].mxu0
    %v1151 = vpop.f32.mrb[0].mxu0
    %v1152 = vpop.f32.mrb[0].mxu0
    %1153 = vdwg.mxu0
    %v1154 = vmax.f32 %v1149, 0.0
    %v1155 = vpack.c.bf16 %v1154, %v1154
    %v1156 = vld [vmem:[%s6] sm:$0xf]
    %v1157 = vld [vmem:[%s6 + $0x4] sm:$0xf]
    %v1158 = vld [vmem:[%s6 + $0x8] sm:$0xf]
    %v1159 = vld [vmem:[%s6 + $0xc] sm:$0xf]
    %v1160 = vld [vmem:[%s6 + $0x10] sm:$0xf]
    %v1161 = vld [vmem:[%s6 + $0x14] sm:$0xf]
    %v1162 = vld [vmem:[%s6 + $0x18] sm:$0xf]
    %v1163 = vld [vmem:[%s6 + $0x1c] sm:$0xf]
    %v1164 = vld [vmem:[%s13] sm:$0x1]
    %v1166 = vlaneseq
    %v1167 = vshrl.u32 %v1166, 7
    %v1168 = vsub.s32 0, %v1167
    %v1169 = vrot.slane %v1164, %v1168
    %v1179 = vunpack.c.l.b16 %v1156
    %v1180 = vunpack.c.l.b16 %v1157
    %v1181 = vunpack.c.l.b16 %v1158
    %v1182 = vunpack.c.l.b16 %v1159
    %v1183 = vunpack.c.l.b16 %v1160
    %v1184 = vunpack.c.l.b16 %v1161
    %v1185 = vunpack.c.l.b16 %v1162
    %v1186 = vunpack.c.l.b16 %v1163
    %v1187 = vpack.c.b16 %v1180, %v1179
    %v1188 = vpack.c.b16 %v1182, %v1181
    %v1189 = vpack.c.b16 %v1184, %v1183
    %v1190 = vpack.c.b16 %v1186, %v1185
    %vm1195 = vcmask 523264
    %v1197 = vsel %vm1195, %v1155, 0
    %1199 = vmatprep.subr.bf16.mxu0 0
    %1200 = vmatpush1.bf16.msra.mxu0 %v1187
    %1201 = vmatprep.subr.bf16.mxu0 0
    %1202 = vmatpush1.bf16.msra.mxu0 %v1188
    %1203 = vmatprep.subr.bf16.mxu0 0
    %1204 = vmatpush1.bf16.msra.mxu0 %v1189
    %1205 = vmatprep.subr.bf16.mxu0 0
    %1206 = vmatpush1.bf16.msra.mxu0 %v1190
    %1207 = vmatprep.subr.bf16.mxu0 0
    %1208 = vmatpush1.bf16.msra.mxu0 0
    %1209 = vmatprep.subr.bf16.mxu0 0
    %1210 = vmatpush1.bf16.msra.mxu0 0
    %1211 = vmatprep.subr.bf16.mxu0 0
    %1212 = vmatpush1.bf16.msra.mxu0 0
    %1213 = vmatprep.subr.bf16.mxu0 0
    %1214 = vmatpush1.bf16.msra.mxu0 0
    %1215 = vmatprep.subr.bf16.mxu0 0
    %1216 = vmatpush1.bf16.msra.mxu0 0
    %1217 = vmatprep.subr.bf16.mxu0 0
    %1218 = vmatpush1.bf16.msra.mxu0 0
    %1219 = vmatprep.subr.bf16.mxu0 0
    %1220 = vmatpush1.bf16.msra.mxu0 0
    %1221 = vmatprep.subr.bf16.mxu0 0
    %1222 = vmatpush1.bf16.msra.mxu0 0
    %1223 = vmatprep.subr.bf16.mxu0 0
    %1224 = vmatpush1.bf16.msra.mxu0 0
    %1225 = vmatprep.subr.bf16.mxu0 0
    %1226 = vmatpush1.bf16.msra.mxu0 0
    %1227 = vmatprep.subr.bf16.mxu0 0
    %1228 = vmatpush1.bf16.msra.mxu0 0
    %1229 = vmatprep.subr.bf16.mxu0 0
    %1230 = vmatpush1.bf16.msra.mxu0 0
    %1231 = vmatprep.mubr.bf16.mxu0 0
    %1232 = vmatmul.mubr.bf16.gmra.mrb[0].mxu0 %v1197
    %v1233 = vpop.f32.mrb[0].mxu0
    %v1234 = vadd.f32 %v1169, %v1233
    %v1235 = vpop.f32.mrb[0].mxu0
    %v1236 = vpop.f32.mrb[0].mxu0
    %v1237 = vpop.f32.mrb[0].mxu0
    %1238 = vdwg.mxu0
    %v1239 = vmax.f32 %v1234, 0.0
    %v1240 = vpack.c.bf16 %v1239, %v1239
    %v1241 = vld [vmem:[%s7] sm:$0xf]
    %v1242 = vld [vmem:[%s7 + $0x4] sm:$0xf]
    %v1243 = vld [vmem:[%s7 + $0x8] sm:$0xf]
    %v1244 = vld [vmem:[%s7 + $0xc] sm:$0xf]
    %v1245 = vld [vmem:[%s14] sm:$0x1]
    %v1247 = vlaneseq
    %v1248 = vshrl.u32 %v1247, 7
    %v1249 = vsub.s32 0, %v1248
    %v1250 = vrot.slane %v1245, %v1249
    %v1256 = vunpack.c.l.b16 %v1241
    %v1257 = vunpack.c.l.b16 %v1242
    %v1258 = vunpack.c.l.b16 %v1243
    %v1259 = vunpack.c.l.b16 %v1244
    %v1260 = vpack.c.b16 %v1257, %v1256
    %v1261 = vpack.c.b16 %v1259, %v1258
    %v1265 = vsel %vm177, %v1240, 0
    %1267 = vmatprep.subr.bf16.mxu0 0
    %1268 = vmatpush1.bf16.msra.mxu0 %v1260
    %1269 = vmatprep.subr.bf16.mxu0 0
    %1270 = vmatpush1.bf16.msra.mxu0 %v1261
    %1271 = vmatprep.subr.bf16.mxu0 0
    %1272 = vmatpush1.bf16.msra.mxu0 0
    %1273 = vmatprep.subr.bf16.mxu0 0
    %1274 = vmatpush1.bf16.msra.mxu0 0
    %1275 = vmatprep.subr.bf16.mxu0 0
    %1276 = vmatpush1.bf16.msra.mxu0 0
    %1277 = vmatprep.subr.bf16.mxu0 0
    %1278 = vmatpush1.bf16.msra.mxu0 0
    %1279 = vmatprep.subr.bf16.mxu0 0
    %1280 = vmatpush1.bf16.msra.mxu0 0
    %1281 = vmatprep.subr.bf16.mxu0 0
    %1282 = vmatpush1.bf16.msra.mxu0 0
    %1283 = vmatprep.subr.bf16.mxu0 0
    %1284 = vmatpush1.bf16.msra.mxu0 0
    %1285 = vmatprep.subr.bf16.mxu0 0
    %1286 = vmatpush1.bf16.msra.mxu0 0
    %1287 = vmatprep.subr.bf16.mxu0 0
    %1288 = vmatpush1.bf16.msra.mxu0 0
    %1289 = vmatprep.subr.bf16.mxu0 0
    %1290 = vmatpush1.bf16.msra.mxu0 0
    %1291 = vmatprep.subr.bf16.mxu0 0
    %1292 = vmatpush1.bf16.msra.mxu0 0
    %1293 = vmatprep.subr.bf16.mxu0 0
    %1294 = vmatpush1.bf16.msra.mxu0 0
    %1295 = vmatprep.subr.bf16.mxu0 0
    %1296 = vmatpush1.bf16.msra.mxu0 0
    %1297 = vmatprep.subr.bf16.mxu0 0
    %1298 = vmatpush1.bf16.msra.mxu0 0
    %1299 = vmatprep.mubr.bf16.mxu0 0
    %1300 = vmatmul.mubr.bf16.gmra.mrb[0].mxu0 %v1265
    %v1301 = vpop.f32.mrb[0].mxu0
    %v1302 = vadd.f32 %v1250, %v1301
    %v1303 = vpop.f32.mrb[0].mxu0
    %v1304 = vpop.f32.mrb[0].mxu0
    %v1305 = vpop.f32.mrb[0].mxu0
    %1306 = vdwg.mxu0
    %vm1307 = vcmask 64512
    %1308 = vst.msk [vmem:[#allocation10] sm:$0xff] %vm1307, %v1302
    // Predicated region
    $region78: #{tpu_custom_call.1} parent=1 // pred_check
      _
    $region79: #{tpu_custom_call.1} parent=1 // pred_check_branch
      %1310 = sbr.rel (0) target = $region81
    $region80: #{tpu_custom_call.1} parent=1 // pred_region
      %s1312 = ssub.s32 128, 128
      %1313 = vsyncadd [#allocation4], %s1312
      %s1315 = sshll.u32 [#allocation10], 4
      %s1316 = int_to_ptr.vmem [resolvable:$true] %s1315
      %1318 = dma.vmem_to_hbm [thread:$0]  %s1316, 128, %s15, [#allocation4]
    $region81: #{tpu_custom_call.1} parent=1 // pred_fallthru
      _
    // Predicated region
    $region82: #{tpu_custom_call.1} parent=1 // pred_check
      _
    $region83: #{tpu_custom_call.1} parent=1 // pred_check_branch
      %1320 = sbr.rel (0) target = $region85
    $region84: #{tpu_custom_call.1} parent=1 // pred_region
      %1321 = dma.done [#allocation4], 128
    $region85: #{tpu_custom_call.1} parent=1 // pred_fallthru
      _
    %1322 = vsyncpa [#allocation3], 1
    %1323 = vsyncpa [#allocation6], 1
    %1324 = vsyncpa [#allocation9], 1
    %1325 = vsyncpa [#allocation4], 1

</llo_original>
